<compile_context>
chip_gen: v6e
topology: v6e:2x2x1
jax: 0.10.0
libtpu: 0.0.40
codegen_flags: <defaults>
</compile_context>

<pallas_src>
import functools

import jax
import jax.numpy as jnp
from jax.experimental import pallas as pl
from jax.experimental.pallas import tpu as pltpu


def _round_up(x: int, m: int) -> int:
    return ((x + m - 1) // m) * m


def _vmem_capacity_bytes() -> int:
    """Per-core VMEM capacity; conservative (v7x = 64 MiB) if unqueryable."""
    try:
        return int(pltpu.get_tpu_info().vmem_capacity_bytes)
    except Exception:
        return 64 * 1024 * 1024


# --------------------------------------------------------------------------
# Kernel bodies
# --------------------------------------------------------------------------

def _swiglu_body(x_ref, w1f_ref, w2_ref, o_ref, acc_ref):
    """One (token tile, hidden tile) step. acc_ref may alias o_ref (f32 out)."""
    j = pl.program_id(1)
    tn = w2_ref.shape[0]          # hidden tile size (static)

    @pl.when(j == 0)
    def _init():
        acc_ref[...] = jnp.zeros_like(acc_ref)

    x = x_ref[...]                                   # (tm, dim), HBM dtype
    if x.dtype != w1f_ref.dtype:
        x = x.astype(w1f_ref.dtype)                  # cast in-kernel (no HBM pass)

    # Single fused MXU run for the x- and gate-projections of this hidden tile.
    hg = jnp.dot(x, w1f_ref[...], preferred_element_type=jnp.float32)  # (tm, 2*tn)
    h = hg[:, :tn]
    g = hg[:, tn:]
    act = h * (g * jax.nn.sigmoid(g))                # f32 silu(g) * h

    # Output projection for this hidden slice, accumulated in f32.
    acc_ref[...] += jnp.dot(act.astype(w2_ref.dtype), w2_ref[...],
                            preferred_element_type=jnp.float32)        # (tm, dim)

    if acc_ref is not o_ref:
        @pl.when(j == pl.num_programs(1) - 1)
        def _finalize():
            o_ref[...] = acc_ref[...].astype(o_ref.dtype)


def swiglu_kernel_inplace(x_ref, w1f_ref, w2_ref, o_ref):
    """f32 output: accumulate directly in o_ref (saves VMEM scratch)."""
    _swiglu_body(x_ref, w1f_ref, w2_ref, o_ref, o_ref)


def swiglu_kernel_scratch(x_ref, w1f_ref, w2_ref, o_ref, acc_ref):
    """Non-f32 output: accumulate in an f32 VMEM scratch, cast on the last tile."""
    _swiglu_body(x_ref, w1f_ref, w2_ref, o_ref, acc_ref)


# --------------------------------------------------------------------------
# Weight preparation (one-time, hoisted out of the per-call path)
# --------------------------------------------------------------------------

def _select_tn(hidden: int) -> int:
    """Prefer fat hidden tiles (256-wide MXU on v6e/v7x); fall back to hidden."""
    for cand in (512, 256, 128):
        if hidden % cand == 0:
            return cand
    return hidden


def prepare_swiglu_weights(w1, w2, *, tn: int | None = None,
                           compute_dtype=jnp.bfloat16):
    """One-time weight preprocessing.

    Args:
      w1: [2*hidden, dim]  (PyTorch nn.Linear layout; rows [:hidden] = x proj,
          rows [hidden:] = gate proj — matches .chunk(2, dim=-1) of w1(x)).
      w2: [dim, hidden]    (PyTorch nn.Linear layout for the output proj).
      tn: hidden tile size used for the interleaved layout (auto if None).
      compute_dtype: storage/matmul dtype. bf16 by default (2-4x MXU and half
          the weight HBM traffic); pass jnp.float32 for exact-precision runs.
    Returns:
      (w1f, w2_t, tn) ready for swiglu_apply.
    """
    dim, hidden = w2.shape
    assert w1.shape == (2 * hidden, dim), "w1 must be [2*hidden, dim]"
    if compute_dtype is None:
        compute_dtype = w1.dtype
    if tn is None:
        tn = _select_tn(hidden)
    assert hidden % tn == 0, "hidden must be divisible by tn"

    w1_t = w1.T.astype(compute_dtype)            # [dim, 2*hidden]
    w1x = w1_t[:, :hidden]                       # "x" half
    w1g = w1_t[:, hidden:]                       # "gate" half
    nj = hidden // tn
    # Interleave per hidden tile: block j of w1f is [w1x_j | w1g_j] -> one fused dot.
    w1f = jnp.concatenate(
        [w1x.reshape(dim, nj, tn), w1g.reshape(dim, nj, tn)], axis=2
    ).reshape(dim, 2 * hidden)
    w2_t = w2.T.astype(compute_dtype)            # [hidden, dim]
    return w1f, w2_t, tn


# --------------------------------------------------------------------------
# Tile / VMEM configuration (generation-aware, all static Python at trace time)
# --------------------------------------------------------------------------

def _choose_config(M, dim, tn, x_dtype, w_dtype, out_dtype, tm_req):
    xbytes = jnp.dtype(x_dtype).itemsize
    wbytes = jnp.dtype(w_dtype).itemsize
    obytes = jnp.dtype(out_dtype).itemsize
    use_scratch = jnp.dtype(out_dtype) != jnp.dtype(jnp.float32)

    capacity = _vmem_capacity_bytes()
    # Leave ~20% headroom for Mosaic internal scratch / semaphores:
    #   128 MiB (v5e/v6e) -> ~102 MiB budget; 64 MiB (v7x) -> ~51 MiB budget.
    budget = max(int(capacity * 0.8), 32 * 1024 * 1024)
    budget = min(budget, capacity)
    # v7x's roofline (~310 FLOP/byte) is compute-bound well below tm=512;
    # v5e/v6e want bigger token tiles to amortize weight streaming.
    tm_cap = 512 if capacity <= 80 * 1024 * 1024 else 1024

    sub = 16 if xbytes < 4 else 8                 # sublane packing of the x tile
    m_ceiling = _round_up(M, 128) if M >= 128 else _round_up(M, sub)

    # Double-buffered VMEM model.
    weight_fixed = 2 * dim * (2 * tn) * wbytes + 2 * tn * dim * wbytes
    per_row = 2 * dim * xbytes + 2 * dim * obytes + (dim * 4 if use_scratch else 0)

    if tm_req is not None:
        tm = int(tm_req)
    else:
        tm = int(max((budget - weight_fixed) // max(per_row, 1), sub))
        tm = min(tm, tm_cap)
        if tm >= 128:
            tm = (tm // 128) * 128                # MXU-friendly token tiles
    tm = min(tm, m_ceiling)
    tm = max(sub, (tm // sub) * sub)

    need = weight_fixed + tm * per_row
    vmem_limit = int(min(capacity, max(need + (4 << 20), 32 * 1024 * 1024)))
    return tm, use_scratch, vmem_limit


# --------------------------------------------------------------------------
# Forward pass
# --------------------------------------------------------------------------

@functools.partial(jax.jit, static_argnames=("tn", "tm"))
def swiglu_apply(x, w1f, w2_t, *, tn: int, tm: int | None = None):
    """SwiGLU forward: x [..., dim] -> [..., dim] with prepared weights."""
    dim = x.shape[-1]
    hidden = w2_t.shape[0]
    assert w1f.shape == (dim, 2 * hidden), "w1f must be [dim, 2*hidden]"
    assert w2_t.shape == (hidden, dim), "w2_t must be [hidden, dim]"
    assert hidden % tn == 0, "hidden must be divisible by tn"
    lead = x.shape[:-1]
    out_dtype = x.dtype

    xm = x.reshape(-1, dim)
    M = xm.shape[0]

    tm_sel, use_scratch, vmem_limit = _choose_config(
        M, dim, tn, xm.dtype, w1f.dtype, out_dtype, tm)

    # Pad only the ragged remainder of the last token tile (dtype cast of x is
    # done inside the kernel, so no extra HBM pass over x for the cast).
    m_pad = _round_up(M, tm_sel)
    if m_pad != M:
        xm = jnp.pad(xm, ((0, m_pad - M), (0, 0)))

    grid = (m_pad // tm_sel, hidden // tn)        # tokens (parallel) x hidden (reduction)

    if use_scratch:
        kernel = swiglu_kernel_scratch
        scratch_shapes = [pltpu.VMEM((tm_sel, dim), jnp.float32)]
    else:
        kernel = swiglu_kernel_inplace            # accumulate directly in o_ref
        scratch_shapes = []

    out = pl.pallas_call(
        kernel,
        out_shape=jax.ShapeDtypeStruct((m_pad, dim), out_dtype),
        grid_spec=pltpu.PrefetchScalarGridSpec(
            num_scalar_prefetch=0,
            grid=grid,
            in_specs=[
                pl.BlockSpec((tm_sel, dim), lambda i, j: (i, 0)),     # x tile
                pl.BlockSpec((dim, 2 * tn), lambda i, j: (0, j)),     # fused w1 tile
                pl.BlockSpec((tn, dim), lambda i, j: (j, 0)),         # w2 rows
            ],
            out_specs=pl.BlockSpec((tm_sel, dim), lambda i, j: (i, 0)),
            scratch_shapes=scratch_shapes,
        ),
        compiler_params=pltpu.CompilerParams(
            dimension_semantics=("parallel", "arbitrary"),
            vmem_limit_bytes=vmem_limit,
        ),
    )(xm, w1f, w2_t)

    if m_pad != M:
        out = out[:M]
    return out.reshape(*lead, dim)


def swiglu_pallas(x, w1, w2, *, tm: int | None = None, tn: int | None = None,
                  compute_dtype=jnp.bfloat16):
    """Convenience wrapper taking PyTorch-layout weights (prepares them inline).

    For production, call prepare_swiglu_weights() once and reuse swiglu_apply().
    """
    w1f, w2_t, tn_sel = prepare_swiglu_weights(w1, w2, tn=tn,
                                               compute_dtype=compute_dtype)
    return swiglu_apply(x, w1f, w2_t, tn=tn_sel, tm=tm)


def swiglu_ref(x, w1, w2):
    """Pure-JAX reference matching the PyTorch module semantics."""
    hidden = w2.shape[1]
    y = x @ w1.T                                  # [..., 2*hidden]
    xpart, gate = y[..., :hidden], y[..., hidden:]
    return (jax.nn.silu(gate) * xpart) @ w2.T


if __name__ == "__main__":
    dim = 32          # NOTE: production should use dim % 128 == 0 for lane-dense stores
    hidden_dim = 128
    batch, seq = 2, 8

    key = jax.random.PRNGKey(0)
    kx, k1, k2 = jax.random.split(key, 3)

    # Deterministic synthetic parameters (PyTorch nn.Linear weight shapes).
    x = jax.random.normal(kx, (batch, seq, dim), dtype=jnp.float32)
    w1 = jax.random.normal(k1, (hidden_dim * 2, dim), dtype=jnp.float32) * 0.02
    w2 = jax.random.normal(k2, (dim, hidden_dim), dtype=jnp.float32) * 0.02

    ref = swiglu_ref(x, w1, w2)

    # --- exact-precision path (f32 weights, f32 in-place accumulation) ---
    w1f, w2_t, tn = prepare_swiglu_weights(w1, w2, compute_dtype=jnp.float32)
    out = jax.block_until_ready(swiglu_apply(x, w1f, w2_t, tn=tn))
    assert out.shape == (batch, seq, dim)
    assert jnp.allclose(out, ref, atol=1e-4, rtol=1e-4), "f32 mismatch vs reference"

    # --- production path (bf16 weights + bf16 activations, f32 scratch acc) ---
    w1f_bf, w2_t_bf, tn_bf = prepare_swiglu_weights(w1, w2)   # bf16 default
    out_bf = jax.block_until_ready(
        swiglu_apply(x.astype(jnp.bfloat16), w1f_bf, w2_t_bf, tn=tn_bf))
    assert out_bf.shape == (batch, seq, dim)
    assert jnp.allclose(out_bf.astype(jnp.float32), ref, atol=5e-3, rtol=1e-1), \
        "bf16 mismatch vs reference (beyond mixed-precision tolerance)"

    print("KERNEL_OK")
</pallas_src>

<mosaic_0001>
module attributes {stable_mosaic.version = 11 : i64} {
  func.func @swiglu_kernel_inplace(%arg0: i32, %arg1: i32, %arg2: memref<16x32xf32, #tpu.memory_space<vmem>>, %arg3: memref<32x256xf32, #tpu.memory_space<vmem>>, %arg4: memref<128x32xf32, #tpu.memory_space<vmem>>, %arg5: memref<16x32xf32, #tpu.memory_space<vmem>>) attributes {dimension_semantics = [#tpu.dimension_semantics<parallel>, #tpu.dimension_semantics<arbitrary>], iteration_bounds = array<i64: 1, 1>, scalar_prefetch = 0 : i64, scratch_operands = 0 : i64, tpu.core_type = #tpu.core_type<tc>, window_params = [{transform_indices = @transform_0, window_bounds = array<i64: 16, 32>}, {transform_indices = @transform_1, window_bounds = array<i64: 32, 256>}, {transform_indices = @transform_2, window_bounds = array<i64: 128, 32>}, {transform_indices = @transform_3, window_bounds = array<i64: 16, 32>}]} {
    %c0_i32 = arith.constant 0 : i32
    %0 = arith.cmpi eq, %arg1, %c0_i32 : i32
    %1 = arith.extui %0 : i1 to i32
    %c0_i32_0 = arith.constant 0 : i32
    %2 = arith.cmpi ne, %1, %c0_i32_0 : i32
    scf.if %2 {
      %cst_12 = arith.constant 0.000000e+00 : f32
      %20 = vector.broadcast %cst_12 : f32 to vector<16x32xf32>
      %c0_13 = arith.constant 0 : index
      %c0_14 = arith.constant 0 : index
      %21 = vector.load %arg5[%c0_13, %c0_14] : memref<16x32xf32, #tpu.memory_space<vmem>>, vector<16x32xf32>
      tpu.vector_store %arg5[%c0_13, %c0_14], %20 {strides = array<i32>} : memref<16x32xf32, #tpu.memory_space<vmem>>, vector<16x32xf32>,
    } else {
    }
    %c0 = arith.constant 0 : index
    %c0_1 = arith.constant 0 : index
    %3 = vector.load %arg2[%c0, %c0_1] : memref<16x32xf32, #tpu.memory_space<vmem>>, vector<16x32xf32>
    %c0_2 = arith.constant 0 : index
    %c0_3 = arith.constant 0 : index
    %4 = vector.load %arg3[%c0_2, %c0_3] : memref<32x256xf32, #tpu.memory_space<vmem>>, vector<32x256xf32>
    %cst = arith.constant dense<0.000000e+00> : vector<16x256xf32>
    %5 = tpu.matmul %3, %4, %cst {dimension_numbers = #tpu.dot_dimension_numbers<[1], [0], [0], [1], [0, 0, 1, 1], [], []>} : vector<16x32xf32>, vector<32x256xf32>, vector<16x256xf32> -> vector<16x256xf32>
    %6 = vector.extract_strided_slice %5 {offsets = [0, 0], sizes = [16, 128], strides = [1, 1]} : vector<16x256xf32> to vector<16x128xf32>
    %7 = vector.extract_strided_slice %5 {offsets = [0, 128], sizes = [16, 128], strides = [1, 1]} : vector<16x256xf32> to vector<16x128xf32>
    %8 = arith.negf %7 : vector<16x128xf32>
    %9 = math.exp %8 : vector<16x128xf32>
    %cst_4 = arith.constant 1.000000e+00 : f32
    %10 = vector.broadcast %cst_4 : f32 to vector<16x128xf32>
    %11 = arith.addf %10, %9 : vector<16x128xf32>
    %12 = arith.divf %10, %11 : vector<16x128xf32>
    %13 = arith.mulf %7, %12 : vector<16x128xf32>
    %14 = arith.mulf %6, %13 : vector<16x128xf32>
    %c0_5 = arith.constant 0 : index
    %c0_6 = arith.constant 0 : index
    %15 = vector.load %arg5[%c0_5, %c0_6] : memref<16x32xf32, #tpu.memory_space<vmem>>, vector<16x32xf32>
    %c0_7 = arith.constant 0 : index
    %c0_8 = arith.constant 0 : index
    %16 = vector.load %arg4[%c0_7, %c0_8] : memref<128x32xf32, #tpu.memory_space<vmem>>, vector<128x32xf32>
    %cst_9 = arith.constant dense<0.000000e+00> : vector<16x32xf32>
    %17 = tpu.matmul %14, %16, %cst_9 {dimension_numbers = #tpu.dot_dimension_numbers<[1], [0], [0], [1], [0, 0, 1, 1], [], []>} : vector<16x128xf32>, vector<128x32xf32>, vector<16x32xf32> -> vector<16x32xf32>
    %18 = arith.addf %15, %17 : vector<16x32xf32>
    %c0_10 = arith.constant 0 : index
    %c0_11 = arith.constant 0 : index
    %19 = vector.load %arg5[%c0_10, %c0_11] : memref<16x32xf32, #tpu.memory_space<vmem>>, vector<16x32xf32>
    tpu.vector_store %arg5[%c0_10, %c0_11], %18 {strides = array<i32>} : memref<16x32xf32, #tpu.memory_space<vmem>>, vector<16x32xf32>,
    return
  }
  func.func @transform_0(%arg0: i32, %arg1: i32) -> (i32, i32) {
    %c0_i32 = arith.constant 0 : i32
    %c0_i32_0 = arith.constant 0 : i32
    return %arg0, %c0_i32 : i32, i32
  }
  func.func @transform_1(%arg0: i32, %arg1: i32) -> (i32, i32) {
    %c0_i32 = arith.constant 0 : i32
    %c0_i32_0 = arith.constant 0 : i32
    return %c0_i32, %arg1 : i32, i32
  }
  func.func @transform_2(%arg0: i32, %arg1: i32) -> (i32, i32) {
    %c0_i32 = arith.constant 0 : i32
    %c0_i32_0 = arith.constant 0 : i32
    return %arg1, %c0_i32 : i32, i32
  }
  func.func @transform_3(%arg0: i32, %arg1: i32) -> (i32, i32) {
    %c0_i32 = arith.constant 0 : i32
    %c0_i32_0 = arith.constant 0 : i32
    return %arg0, %c0_i32 : i32, i32
  }
}

</mosaic_0001>

<llo_original>
// kernel: swiglu_apply.1
$region0: #{swiglu_apply.1}
  #allocation0 [shape = 'u32[]', space=smem, size = 0x4, offset = 0x4, fixed_abs, tag = 'smem constant byte address 0x4 - core index']
  #allocation1 [shape = 'u32[144,128]{1,0:T(1,128)}', space=vmem, size = 0x12000, scoped, tag = 'internal scratch']
  %s0 = inlined_call_operand.vmem [shape: f32[16,32], index: 0, kind: input, shape index: {}]
  %s1 = inlined_call_operand.vmem [shape: f32[32,256], index: 1, kind: input, shape index: {}]
  %s2 = inlined_call_operand.vmem [shape: f32[128,32], index: 2, kind: input, shape index: {}]
  %s3 = inlined_call_operand.hbm [shape: f32[16,32], index: 3, kind: output, shape index: {}]
  %s4 = sld [smem:[#allocation0]]
  $region26: #{swiglu_apply.1} parent=0
    _
  %s6 = ssub.s32 1, %s4
  %s7 = scalar_select 0, %s6, %s4
  $region1: #{swiglu_apply.1} parent=0
    #allocation2 [shape = 'u8[8192]{0}', space=vmem, size = 0x2000, scoped, tag = 'output window, operand 0, single buffered']
    #allocation3 [shape = 's32[1]{0}', space=sflag, size = 0x4, scoped, tag = 'scoped memory for swiglu_apply.1']
    %8 = vsyncpa [#allocation3], 0
    // Predicated region
    $region2: #{swiglu_apply.1} parent=1 // pred_check
      _
    $region3: #{swiglu_apply.1} parent=1 // pred_check_branch
      %10 = sbr.rel (0) target = $region5
    $region4: #{swiglu_apply.1} parent=1 // pred_region
      _
    $region5: #{swiglu_apply.1} parent=1 // pred_fallthru
      _
    // Predicated region
    $region6: #{swiglu_apply.1} parent=1 // pred_check
      _
    $region7: #{swiglu_apply.1} parent=1 // pred_check_branch
      %12 = sbr.rel (0) target = $region9
    $region8: #{swiglu_apply.1} parent=1 // pred_region
      _
    $region9: #{swiglu_apply.1} parent=1 // pred_fallthru
      _
    // Predicated region
    $region10: #{swiglu_apply.1} parent=1 // pred_check
      _
    $region11: #{swiglu_apply.1} parent=1 // pred_check_branch
      %14 = sbr.rel (0) target = $region13
    $region12: #{swiglu_apply.1} parent=1 // pred_region
      _
    $region13: #{swiglu_apply.1} parent=1 // pred_fallthru
      _
    %p15 = scmp.eq.s32.totalorder 0, 0
    // Predicated region
    $region14: #{swiglu_apply.1} parent=1 // pred_check
      %p16 = pneg %p15
    $region15: #{swiglu_apply.1} parent=1 // pred_check_branch
      %18 = sbr.rel (%p16) target = $region17
    $region16: #{swiglu_apply.1} parent=1 // pred_region
      %vm19 = vcmask 261120
      %20 = vst.msk [vmem:[#allocation2] sm:$0xff] %vm19, 0.0
      %21 = vst.msk [vmem:[#allocation2 + $0x8] sm:$0xff] %vm19, 0.0
    $region17: #{swiglu_apply.1} parent=1 // pred_fallthru
      _
    %v22 = vld [vmem:[%s0] sm:$0xff]
    %v23 = vld [vmem:[%s0 + $0x8] sm:$0xff]
    %v24 = vld [vmem:[%s1] sm:$0xff]
    %v25 = vld [vmem:[%s1 + $0x8] sm:$0xff]
    %v26 = vld [vmem:[%s1 + $0x10] sm:$0xff]
    %v27 = vld [vmem:[%s1 + $0x18] sm:$0xff]
    %v28 = vld [vmem:[%s1 + $0x20] sm:$0xff]
    %v29 = vld [vmem:[%s1 + $0x28] sm:$0xff]
    %v30 = vld [vmem:[%s1 + $0x30] sm:$0xff]
    %v31 = vld [vmem:[%s1 + $0x38] sm:$0xff]
    %vm32 = vcmask 261120
    %v34 = vsel %vm32, %v22, 0
    %v37 = vsel %vm32, %v23, 0
    %39 = vmatprep.subr.mxu0 0.0
    %40 = vmatpush1.msra.mxu0 0.0
    %41 = vmatprep.subr.mxu0 0.0
    %42 = vmatpush1.msra.mxu0 0.0
    %43 = vmatprep.subr.mxu0 0.0
    %44 = vmatpush1.msra.mxu0 0.0
    %45 = vmatprep.subr.mxu0 0.0
    %46 = vmatpush1.msra.mxu0 0.0
    %47 = vmatprep.subr.mxu0 0.0
    %48 = vmatpush1.msra.mxu0 0.0
    %49 = vmatprep.subr.mxu0 0.0
    %50 = vmatpush1.msra.mxu0 0.0
    %51 = vmatprep.subr.mxu0 0.0
    %52 = vmatpush1.msra.mxu0 0.0
    %53 = vmatprep.subr.mxu0 0.0
    %54 = vmatpush1.msra.mxu0 0.0
    %55 = vmatprep.subr.mxu0 0.0
    %56 = vmatpush1.msra.mxu0 0.0
    %57 = vmatprep.subr.mxu0 0.0
    %58 = vmatpush1.msra.mxu0 0.0
    %59 = vmatprep.subr.mxu0 0.0
    %60 = vmatpush1.msra.mxu0 0.0
    %61 = vmatprep.subr.mxu0 0.0
    %62 = vmatpush1.msra.mxu0 0.0
    %63 = vmatprep.subr.mxu0 %v31
    %64 = vmatpush1.msra.mxu0 %v30
    %65 = vmatprep.subr.mxu0 %v29
    %66 = vmatpush1.msra.mxu0 %v28
    %67 = vmatprep.subr.mxu0 %v27
    %68 = vmatpush1.msra.mxu0 %v26
    %69 = vmatprep.subr.mxu0 %v25
    %70 = vmatpush1.msra.mxu0 %v24
    %71 = vmatprep.subr.mxu0 0.0
    %72 = vmatpush2.msra.mxu0 0.0
    %73 = vmatprep.subr.mxu0 0.0
    %74 = vmatpush2.msra.mxu0 0.0
    %75 = vmatprep.subr.mxu0 0.0
    %76 = vmatpush2.msra.mxu0 0.0
    %77 = vmatprep.subr.mxu0 0.0
    %78 = vmatpush2.msra.mxu0 0.0
    %79 = vmatprep.subr.mxu0 0.0
    %80 = vmatpush2.msra.mxu0 0.0
    %81 = vmatprep.subr.mxu0 0.0
    %82 = vmatpush2.msra.mxu0 0.0
    %83 = vmatprep.subr.mxu0 0.0
    %84 = vmatpush2.msra.mxu0 0.0
    %85 = vmatprep.subr.mxu0 0.0
    %86 = vmatpush2.msra.mxu0 0.0
    %87 = vmatprep.subr.mxu0 0.0
    %88 = vmatpush2.msra.mxu0 0.0
    %89 = vmatprep.subr.mxu0 0.0
    %90 = vmatpush2.msra.mxu0 0.0
    %91 = vmatprep.subr.mxu0 0.0
    %92 = vmatpush2.msra.mxu0 0.0
    %93 = vmatprep.subr.mxu0 0.0
    %94 = vmatpush2.msra.mxu0 0.0
    %95 = vmatprep.subr.mxu0 0.0
    %96 = vmatpush2.msra.mxu0 0.0
    %97 = vmatprep.subr.mxu0 0.0
    %98 = vmatpush2.msra.mxu0 0.0
    %99 = vmatprep.subr.mxu0 0.0
    %100 = vmatpush2.msra.mxu0 0.0
    %101 = vmatprep.subr.mxu0 0.0
    %102 = vmatpush2.msra.mxu0 0.0
    %103 = vmatprep.mubr.f32.mxu0 0.0
    %104 = vmatmul.mubr.f32.gmra.mxu0 %v34
    %v105 = vpop.f32.mrf.mxu0
    %v106 = vadd.f32 0.0, %v105
    %v107 = vpop.f32.mrf.mxu0
    %v108 = vadd.f32 0.0, %v107
    %109 = vmatprep.mubr.f32.mxu0 0.0
    %110 = vmatmul.mubr.f32.gmra.mxu0 %v37
    %v111 = vpop.f32.mrf.mxu0
    %v112 = vadd.f32 0.0, %v111
    %v113 = vpop.f32.mrf.mxu0
    %v114 = vadd.f32 0.0, %v113
    %115 = vdwg.mxu0
    %v116 = vxor.u32 %v108, 2147483648
    %v117 = vxor.u32 %v114, 2147483648
    %v118 = vmul.f32 %v116, 1.442695
    %v119 = vpow.pop %v118
    %v120 = vmul.f32 %v117, 1.442695
    %v121 = vpow.pop %v120
    %v122 = vadd.f32 %v119, 1.0
    %v123 = vadd.f32 %v121, 1.0
    %v124 = vrcp.pop %v122
    %v125 = vmul.f32 1.0, %v124
    %v126 = vrcp.pop %v123
    %v127 = vmul.f32 1.0, %v126
    %v128 = vmul.f32 %v108, %v125
    %v129 = vmul.f32 %v114, %v127
    %v130 = vmul.f32 %v106, %v128
    %v131 = vmul.f32 %v112, %v129
    %v132 = vld [vmem:[#allocation2] sm:$0xff]
    %v133 = vld [vmem:[#allocation2 + $0x8] sm:$0xff]
    %v134 = vld [vmem:[%s2] sm:$0xff]
    %v135 = vld [vmem:[%s2 + $0x8] sm:$0xff]
    %v136 = vld [vmem:[%s2 + $0x10] sm:$0xff]
    %v137 = vld [vmem:[%s2 + $0x18] sm:$0xff]
    %v138 = vld [vmem:[%s2 + $0x20] sm:$0xff]
    %v139 = vld [vmem:[%s2 + $0x28] sm:$0xff]
    %v140 = vld [vmem:[%s2 + $0x30] sm:$0xff]
    %v141 = vld [vmem:[%s2 + $0x38] sm:$0xff]
    %v142 = vld [vmem:[%s2 + $0x40] sm:$0xff]
    %v143 = vld [vmem:[%s2 + $0x48] sm:$0xff]
    %v144 = vld [vmem:[%s2 + $0x50] sm:$0xff]
    %v145 = vld [vmem:[%s2 + $0x58] sm:$0xff]
    %v146 = vld [vmem:[%s2 + $0x60] sm:$0xff]
    %v147 = vld [vmem:[%s2 + $0x68] sm:$0xff]
    %v148 = vld [vmem:[%s2 + $0x70] sm:$0xff]
    %v149 = vld [vmem:[%s2 + $0x78] sm:$0xff]
    %150 = vmatprep.subr.mxu0 0.0
    %151 = vmatpush1.msra.mxu0 %v149
    %152 = vmatprep.subr.mxu0 0.0
    %153 = vmatpush1.msra.mxu0 %v148
    %154 = vmatprep.subr.mxu0 0.0
    %155 = vmatpush1.msra.mxu0 %v147
    %156 = vmatprep.subr.mxu0 0.0
    %157 = vmatpush1.msra.mxu0 %v146
    %158 = vmatprep.subr.mxu0 0.0
    %159 = vmatpush1.msra.mxu0 %v145
    %160 = vmatprep.subr.mxu0 0.0
    %161 = vmatpush1.msra.mxu0 %v144
    %162 = vmatprep.subr.mxu0 0.0
    %163 = vmatpush1.msra.mxu0 %v143
    %164 = vmatprep.subr.mxu0 0.0
    %165 = vmatpush1.msra.mxu0 %v142
    %166 = vmatprep.subr.mxu0 0.0
    %167 = vmatpush1.msra.mxu0 %v141
    %168 = vmatprep.subr.mxu0 0.0
    %169 = vmatpush1.msra.mxu0 %v140
    %170 = vmatprep.subr.mxu0 0.0
    %171 = vmatpush1.msra.mxu0 %v139
    %172 = vmatprep.subr.mxu0 0.0
    %173 = vmatpush1.msra.mxu0 %v138
    %174 = vmatprep.subr.mxu0 0.0
    %175 = vmatpush1.msra.mxu0 %v137
    %176 = vmatprep.subr.mxu0 0.0
    %177 = vmatpush1.msra.mxu0 %v136
    %178 = vmatprep.subr.mxu0 0.0
    %179 = vmatpush1.msra.mxu0 %v135
    %180 = vmatprep.subr.mxu0 0.0
    %181 = vmatpush1.msra.mxu0 %v134
    %182 = vmatprep.subr.mxu0 0.0
    %183 = vmatpush2.msra.mxu0 0.0
    %184 = vmatprep.subr.mxu0 0.0
    %185 = vmatpush2.msra.mxu0 0.0
    %186 = vmatprep.subr.mxu0 0.0
    %187 = vmatpush2.msra.mxu0 0.0
    %188 = vmatprep.subr.mxu0 0.0
    %189 = vmatpush2.msra.mxu0 0.0
    %190 = vmatprep.subr.mxu0 0.0
    %191 = vmatpush2.msra.mxu0 0.0
    %192 = vmatprep.subr.mxu0 0.0
    %193 = vmatpush2.msra.mxu0 0.0
    %194 = vmatprep.subr.mxu0 0.0
    %195 = vmatpush2.msra.mxu0 0.0
    %196 = vmatprep.subr.mxu0 0.0
    %197 = vmatpush2.msra.mxu0 0.0
    %198 = vmatprep.subr.mxu0 0.0
    %199 = vmatpush2.msra.mxu0 0.0
    %200 = vmatprep.subr.mxu0 0.0
    %201 = vmatpush2.msra.mxu0 0.0
    %202 = vmatprep.subr.mxu0 0.0
    %203 = vmatpush2.msra.mxu0 0.0
    %204 = vmatprep.subr.mxu0 0.0
    %205 = vmatpush2.msra.mxu0 0.0
    %206 = vmatprep.subr.mxu0 0.0
    %207 = vmatpush2.msra.mxu0 0.0
    %208 = vmatprep.subr.mxu0 0.0
    %209 = vmatpush2.msra.mxu0 0.0
    %210 = vmatprep.subr.mxu0 0.0
    %211 = vmatpush2.msra.mxu0 0.0
    %212 = vmatprep.subr.mxu0 0.0
    %213 = vmatpush2.msra.mxu0 0.0
    %214 = vmatprep.mubr.f32.mxu0 0.0
    %215 = vmatmul.mubr.f32.gmra.mxu0 %v130
    %v216 = vpop.f32.mrf.mxu0
    %v217 = vadd.f32 0.0, %v216
    %v218 = vpop.f32.mrf.mxu0
    %219 = vmatprep.mubr.f32.mxu0 0.0
    %220 = vmatmul.mubr.f32.gmra.mxu0 %v131
    %v221 = vpop.f32.mrf.mxu0
    %v222 = vadd.f32 0.0, %v221
    %v223 = vpop.f32.mrf.mxu0
    %224 = vdwg.mxu0
    %v225 = vadd.f32 %v132, %v217
    %v226 = vadd.f32 %v133, %v222
    %227 = vst.msk [vmem:[#allocation2] sm:$0xff] %vm32, %v225
    %228 = vst.msk [vmem:[#allocation2 + $0x8] sm:$0xff] %vm32, %v226
    // Predicated region
    $region18: #{swiglu_apply.1} parent=1 // pred_check
      _
    $region19: #{swiglu_apply.1} parent=1 // pred_check_branch
      %230 = sbr.rel (0) target = $region21
    $region20: #{swiglu_apply.1} parent=1 // pred_region
      %s232 = ssub.s32 256, 256
      %233 = vsyncadd [#allocation3], %s232
      %s234 = sshll.u32 [#allocation2], 4
      %s235 = int_to_ptr.vmem [resolvable:$true] %s234
      %240 = dma.vmem_to_hbm [thread:$0]  %s235, 256, %s3, [#allocation3], 128, 128, 8
    $region21: #{swiglu_apply.1} parent=1 // pred_fallthru
      _
    // Predicated region
    $region22: #{swiglu_apply.1} parent=1 // pred_check
      _
    $region23: #{swiglu_apply.1} parent=1 // pred_check_branch
      %242 = sbr.rel (0) target = $region25
    $region24: #{swiglu_apply.1} parent=1 // pred_region
      %243 = dma.done [#allocation3], 256
    $region25: #{swiglu_apply.1} parent=1 // pred_fallthru
      _
    %244 = vsyncpa [#allocation3], 1

</llo_original>
